<compile_context>
chip_gen: v7x
topology: tpu7x:2x2x1
jax: 0.10.0
libtpu: 0.0.40
codegen_flags: <defaults>
</compile_context>

<pallas_src>
import jax
import jax.numpy as jnp
import numpy as np
from jax.experimental import pallas as pl
from jax.experimental.pallas import tpu as pltpu  # noqa: F401  (TPU backend)


NUM_FRAMES = 8     # frames in the (synthetic) predicted-pose sequence
NUM_JOINTS = 21    # standard hand skeleton
NUM_COORDS = 3     # (u, v, d)


# ---------------------------------------------------------------------------
# Pallas kernel: forward() is the identity on the parameter.  The output HBM
# buffer aliases the input HBM buffer, so there is nothing to move or compute.
# ---------------------------------------------------------------------------
def _forward_kernel(w_ref, o_ref):
    # Bytes already live in the (aliased) output buffer; deliberately a no-op.
    del w_ref, o_ref


def _pallas_identity(weights: jax.Array) -> jax.Array:
    nbytes = weights.size * weights.dtype.itemsize
    return pl.pallas_call(
        _forward_kernel,
        out_shape=jax.ShapeDtypeStruct(weights.shape, weights.dtype),
        in_specs=[pl.BlockSpec(memory_space=pl.ANY)],   # raw HBM ref, no auto-DMA
        out_specs=pl.BlockSpec(memory_space=pl.ANY),    # raw HBM ref, no auto-DMA
        input_output_aliases={0: 0},
        cost_estimate=pl.CostEstimate(
            flops=0, transcendentals=0, bytes_accessed=nbytes),
    )(weights)


# Differentiable identity: the PyTorch module returns the trainable parameter
# precisely so it can receive gradients; keep that property through Pallas.
@jax.custom_vjp
def _model_forward(weights: jax.Array) -> jax.Array:
    return _pallas_identity(weights)


def _model_forward_fwd(weights):
    return _pallas_identity(weights), None


def _model_forward_bwd(_, g):
    return (g,)


_model_forward.defvjp(_model_forward_fwd, _model_forward_bwd)

# donate_argnums=0 makes input_output_aliases real (no defensive copy) and
# removes eager dispatch.  NOTE: the caller's `weights` handle is consumed.
model_forward = jax.jit(_model_forward, donate_argnums=0)


# ---------------------------------------------------------------------------
# Parameter initialization mirroring Model.initPose(idx, ref_cam):
#   - three camera predictions of hand-pose sequences (deterministic synthetic
#     data from PRNGKey(0) instead of reading the .json file)
#   - mean over the three cameras
#   - select frame `idx`
# TODO(synk): original module reads onlyHandWorldCoordinate_uvd.json; replaced
# with in-script synthetic data since no file I/O is allowed.
# ---------------------------------------------------------------------------
def init_pose(idx: int, key) -> jax.Array:
    k0, k1, k2 = jax.random.split(key, 3)
    shape = (NUM_FRAMES, NUM_JOINTS, NUM_COORDS)
    handpose_0 = jax.random.normal(k0, shape, dtype=jnp.float32) * 10.0
    handpose_1 = jax.random.normal(k1, shape, dtype=jnp.float32) * 10.0
    handpose_2 = jax.random.normal(k2, shape, dtype=jnp.float32) * 10.0
    init_joint = jnp.mean(jnp.stack([handpose_0, handpose_1, handpose_2]), axis=0)
    return init_joint[idx]  # (NUM_JOINTS, NUM_COORDS) -- the nn.Parameter


if __name__ == "__main__":
    key = jax.random.PRNGKey(0)
    idx = 0  # frame index, as in Model(idx, ref_cam)
    weights = init_pose(idx, key)            # (21, 3) float32 parameter

    # Snapshot expected value on host BEFORE the call: the input buffer is
    # donated (and the output aliases it), so `weights` is consumed.
    expected = np.asarray(weights)

    out = model_forward(weights)
    out = jax.block_until_ready(out)

    # forward() semantics: output is exactly the parameter tensor
    np.testing.assert_allclose(np.asarray(out), expected, rtol=0, atol=0)
    assert out.shape == (NUM_JOINTS, NUM_COORDS)
    assert out.dtype == jnp.float32

    print("KERNEL_OK")
</pallas_src>

<mosaic_0001>
module attributes {stable_mosaic.version = 11 : i64} {
  func.func @_forward_kernel(%arg0: memref<21x3xf32, #tpu.memory_space<any>>, %arg1: memref<21x3xf32, #tpu.memory_space<any>>) attributes {dimension_semantics = [], scalar_prefetch = 0 : i64, scratch_operands = 0 : i64, tpu.core_type = #tpu.core_type<tc>} {
    return
  }
}

</mosaic_0001>

<llo_original>
// kernel: _model_forward.1
$region0: #{_model_forward.1}
  #allocation0 [shape = 'u32[]', space=smem, size = 0x4, offset = 0x4, fixed_abs, tag = 'smem constant byte address 0x4 - core index']
  #allocation1 [shape = 'u32[144,128]{1,0:T(1,128)}', space=vmem, size = 0x12000, scoped, tag = 'internal scratch']
  %s0 = inlined_call_operand.vmem [shape: f32[21,3], index: 0, kind: input, shape index: {}, may-alias: {0,1}]
  %s1 = inlined_call_operand.vmem [shape: f32[21,3], index: 1, kind: output, shape index: {}, may-alias: {0,1}]
  %s2 = sld [smem:[#allocation0]]
  $region2: #{_model_forward.1} parent=0
    _
  %s4 = ssub.s32 1, %s2
  %s5 = scalar_select 0, %s4, %s2

</llo_original>
